<compile_context>
chip_gen: v6e
topology: v6e:2x2x1
jax: 0.10.0
libtpu: 0.0.40
codegen_flags: <defaults>
</compile_context>

<pallas_src>
import jax
import jax.numpy as jnp
from jax.experimental import pallas as pl
from jax.experimental.pallas import tpu as pltpu


def _round_up(x, m):
    return (x + m - 1) // m * m


def _ac_critic_kernel(x_ref, w1_ref, b1_ref, w2_ref, b2_ref, w3r_ref, b3_ref,
                      out_ref):
    """Fused 3-layer MLP for one batch tile.

    x_ref:   (TILE_B, D)    VMEM (f32 from HBM; cast to weight dtype in-kernel)
    w1_ref:  (D, H1)        VMEM (resident)
    b1_ref:  (1, H1)        VMEM (resident)
    w2_ref:  (H1, H2)       VMEM (resident)
    b2_ref:  (1, H2)        VMEM (resident)
    w3r_ref: (1, H2)        VMEM (resident)  -- W3 column stored as a row
    b3_ref:  (1, 1)         SMEM scalar
    out_ref: (1, TILE_B)    VMEM (lane-dense)
    """
    # Layer 1: (TILE_B, D) @ (D, H1) on the MXU; bias + tanh in f32 (VPU/EUP).
    x = x_ref[...].astype(w1_ref.dtype)
    h1 = jnp.dot(x, w1_ref[...], preferred_element_type=jnp.float32)
    h1 = jnp.tanh(h1 + b1_ref[...].astype(jnp.float32))

    # Layer 2: (TILE_B, H1) @ (H1, H2).
    h2 = jnp.dot(h1.astype(w2_ref.dtype), w2_ref[...],
                 preferred_element_type=jnp.float32)
    h2 = jnp.tanh(h2 + b2_ref[...].astype(jnp.float32))

    # Output head (N=1): VPU multiply + last-axis (lane) reduce instead of a
    # nearly-empty MXU pass.
    v = jnp.sum(h2 * w3r_ref[...].astype(jnp.float32), axis=-1) + b3_ref[0, 0]

    # Lane-dense store: one (1, TILE_B) slab per tile (TILE_B multiple of 128).
    out_ref[...] = v.reshape(out_ref.shape).astype(out_ref.dtype)


def _choose_tile_b(batch, tile_b_max):
    """Pick a batch tile: multiple of 128, <= tile_b_max, and split into >= 2
    grid tiles when the batch allows it (so v7x's second core isn't idle)."""
    tile_b_max = max(128, _round_up(int(tile_b_max), 128))
    if batch <= 128:
        return 128
    target = _round_up(-(-batch // 2), 128)     # ceil(B/2), 128-aligned
    return min(tile_b_max, target)


def ac_critic_forward(x, params, *, tile_b_max=2048, use_bf16=False):
    """ACCritic forward: (B, input_size) -> (B, 1) via one pallas_call.

    params: dict with w1 (D,H1), b1 (1,H1), w2 (H1,H2), b2 (1,H2),
            w3 (H2,1), b3 (1,1)   (all float32)
    """
    B, D = x.shape
    w1, b1 = params["w1"], params["b1"]
    w2, b2 = params["w2"], params["b2"]
    w3, b3 = params["w3"], params["b3"]
    H1 = w1.shape[1]
    H2 = w2.shape[1]

    # W3 (H2, 1) -> row (1, H2) for the VPU-reduce output head; b3 -> (1,1).
    w3_row = w3.reshape(1, H2).astype(jnp.float32)
    b3_s = b3.reshape(1, 1).astype(jnp.float32)

    xp = x.astype(jnp.float32)          # no-op for f32 producers (no HBM pass)
    if use_bf16:
        # Only the ~25 KB weights are pre-cast; x stays in HBM as-is and is
        # cast in-kernel (avoids an extra full HBM pass over the batch).
        w1 = w1.astype(jnp.bfloat16)
        w2 = w2.astype(jnp.bfloat16)

    # Batch tiling: tile_b is a multiple of 128 (lane-dense output, clean
    # sublane alignment).  x is NOT padded; the last (ragged) tile's extra
    # rows read unspecified values, which only affect padded output rows that
    # are sliced off below.
    tile_b = _choose_tile_b(B, tile_b_max)
    num_tiles = pl.cdiv(B, tile_b)
    b_pad = num_tiles * tile_b

    # Per-tile VMEM footprint: double-buffered x + output, lane-padded f32
    # h1/h2 temporaries, plus the resident weights.  Set the scoped-VMEM limit
    # explicitly (v5e's default is only 16 MiB); cap well under v7x's 64 MiB.
    w_bytes = 4 * (D * H1 + H1 + H1 * H2 + H2 + H2 + 1) * 2
    vmem_est = (2 * tile_b * D * xp.dtype.itemsize      # x (double-buffered)
                + 2 * tile_b * 4                        # output slab
                + 2 * tile_b * 128 * 4                  # lane-padded h1/h2
                + w_bytes)
    vmem_limit = int(min(48 << 20, max(32 << 20, 2 * vmem_est)))

    cost = pl.CostEstimate(
        flops=2 * B * (D * H1 + H1 * H2 + H2),
        transcendentals=B * (H1 + H2),
        bytes_accessed=(xp.size * xp.dtype.itemsize
                        + b_pad * 4
                        + sum(int(a.size) * a.dtype.itemsize
                              for a in (w1, b1, w2, b2, w3_row, b3_s))),
    )

    def resident(a):
        # Constant block index -> Pallas keeps the block resident (no re-DMA).
        return pl.BlockSpec(a.shape, lambda i: (0,) * a.ndim)

    out = pl.pallas_call(
        _ac_critic_kernel,
        out_shape=jax.ShapeDtypeStruct((1, b_pad), jnp.float32),
        grid=(num_tiles,),
        in_specs=[
            pl.BlockSpec((tile_b, D), lambda i: (i, 0)),        # x batch tile
            resident(w1), resident(b1),                          # layer 1
            resident(w2), resident(b2),                          # layer 2
            resident(w3_row),                                    # head weights
            pl.BlockSpec(memory_space=pltpu.MemorySpace.SMEM),   # b3 scalar
        ],
        out_specs=pl.BlockSpec((1, tile_b), lambda i: (0, i)),
        compiler_params=pltpu.CompilerParams(
            dimension_semantics=("parallel",),
            vmem_limit_bytes=vmem_limit),
        cost_estimate=cost,
    )(xp, w1, b1, w2, b2, w3_row, b3_s)

    # Layout plumbing back to the module's (B, 1) output; cheap in the wrapper.
    return out[0, :B].reshape(B, 1)


def init_params(key, input_size, hidden_sizes=(64, 64), output_size=1):
    """Deterministic synthetic init (uniform fan-in scaling, like nn.Linear)."""
    sizes = (input_size,) + tuple(hidden_sizes) + (output_size,)
    params = {}
    keys = jax.random.split(key, len(sizes) - 1)
    for i, (fan_in, fan_out) in enumerate(zip(sizes[:-1], sizes[1:]), start=1):
        kw, kb = jax.random.split(keys[i - 1])
        bound = 1.0 / jnp.sqrt(jnp.float32(fan_in))
        params[f"w{i}"] = jax.random.uniform(
            kw, (fan_in, fan_out), jnp.float32, -bound, bound)
        params[f"b{i}"] = jax.random.uniform(
            kb, (1, fan_out), jnp.float32, -bound, bound)
    return params


def _reference_forward(x, params):
    """Pure-JAX reference for correctness checking."""
    h = jnp.tanh(x @ params["w1"] + params["b1"])
    h = jnp.tanh(h @ params["w2"] + params["b2"])
    return h @ params["w3"] + params["b3"]


if __name__ == "__main__":
    key = jax.random.PRNGKey(0)
    k_x, k_p, k_x2 = jax.random.split(key, 3)

    batch, input_size = 8, 32
    hidden_sizes = (64, 64)

    x = jax.random.normal(k_x, (batch, input_size), jnp.float32)
    params = init_params(k_p, input_size, hidden_sizes, output_size=1)

    # Single-tile path (small RL batch).
    out = ac_critic_forward(x, params)
    out = jax.block_until_ready(out)

    ref = _reference_forward(x, params)
    assert out.shape == (batch, 1), out.shape
    assert jnp.allclose(out, ref, atol=1e-5, rtol=1e-5), (
        f"max abs err = {jnp.max(jnp.abs(out - ref))}")

    # Multi-tile path with a ragged (unpadded) last tile.
    batch2 = 200
    x2 = jax.random.normal(k_x2, (batch2, input_size), jnp.float32)
    out2 = jax.block_until_ready(
        ac_critic_forward(x2, params, tile_b_max=128))
    ref2 = _reference_forward(x2, params)
    assert out2.shape == (batch2, 1), out2.shape
    assert jnp.allclose(out2, ref2, atol=1e-5, rtol=1e-5), (
        f"max abs err = {jnp.max(jnp.abs(out2 - ref2))}")

    # TODO(synk): optional feature-major (transposed) formulation for fully
    # lane-dense 64-wide activations; kept row-major here for lowering safety.
    print("KERNEL_OK")
</pallas_src>

<mosaic_0001>
module attributes {stable_mosaic.version = 11 : i64} {
  func.func @_ac_critic_kernel(%arg0: i32, %arg1: memref<128x32xf32, #tpu.memory_space<vmem>>, %arg2: memref<32x64xf32, #tpu.memory_space<vmem>>, %arg3: memref<1x64xf32, #tpu.memory_space<vmem>>, %arg4: memref<64x64xf32, #tpu.memory_space<vmem>>, %arg5: memref<1x64xf32, #tpu.memory_space<vmem>>, %arg6: memref<1x64xf32, #tpu.memory_space<vmem>>, %arg7: memref<1x1xf32, #tpu.memory_space<smem>>, %arg8: memref<1x128xf32, #tpu.memory_space<vmem>>) attributes {dimension_semantics = [#tpu.dimension_semantics<parallel>], iteration_bounds = array<i64: 1>, scalar_prefetch = 0 : i64, scratch_operands = 0 : i64, tpu.core_type = #tpu.core_type<tc>, window_params = [{transform_indices = @transform_0, window_bounds = array<i64: 128, 32>}, {pipeline_mode = #tpu.pipeline_mode<synchronous>, transform_indices = @transform_1, window_bounds = array<i64: 32, 64>}, {pipeline_mode = #tpu.pipeline_mode<synchronous>, transform_indices = @transform_2, window_bounds = array<i64: 1, 64>}, {pipeline_mode = #tpu.pipeline_mode<synchronous>, transform_indices = @transform_3, window_bounds = array<i64: 64, 64>}, {pipeline_mode = #tpu.pipeline_mode<synchronous>, transform_indices = @transform_4, window_bounds = array<i64: 1, 64>}, {pipeline_mode = #tpu.pipeline_mode<synchronous>, transform_indices = @transform_5, window_bounds = array<i64: 1, 64>}, {transform_indices = @transform_6, window_bounds = array<i64: 1, 1>}, {transform_indices = @transform_7, window_bounds = array<i64: 1, 128>}]} {
    %c0 = arith.constant 0 : index
    %c0_0 = arith.constant 0 : index
    %0 = vector.load %arg1[%c0, %c0_0] : memref<128x32xf32, #tpu.memory_space<vmem>>, vector<128x32xf32>
    %c0_1 = arith.constant 0 : index
    %c0_2 = arith.constant 0 : index
    %1 = vector.load %arg2[%c0_1, %c0_2] : memref<32x64xf32, #tpu.memory_space<vmem>>, vector<32x64xf32>
    %cst = arith.constant dense<0.000000e+00> : vector<128x64xf32>
    %2 = tpu.matmul %0, %1, %cst {dimension_numbers = #tpu.dot_dimension_numbers<[1], [0], [0], [1], [0, 0, 1, 1], [], []>} : vector<128x32xf32>, vector<32x64xf32>, vector<128x64xf32> -> vector<128x64xf32>
    %c0_3 = arith.constant 0 : index
    %c0_4 = arith.constant 0 : index
    %3 = vector.load %arg3[%c0_3, %c0_4] : memref<1x64xf32, #tpu.memory_space<vmem>>, vector<1x64xf32>
    %4 = vector.broadcast %3 : vector<1x64xf32> to vector<128x64xf32>
    %5 = arith.addf %2, %4 : vector<128x64xf32>
    %6 = math.tanh %5 : vector<128x64xf32>
    %c0_5 = arith.constant 0 : index
    %c0_6 = arith.constant 0 : index
    %7 = vector.load %arg4[%c0_5, %c0_6] : memref<64x64xf32, #tpu.memory_space<vmem>>, vector<64x64xf32>
    %cst_7 = arith.constant dense<0.000000e+00> : vector<128x64xf32>
    %8 = tpu.matmul %6, %7, %cst_7 {dimension_numbers = #tpu.dot_dimension_numbers<[1], [0], [0], [1], [0, 0, 1, 1], [], []>} : vector<128x64xf32>, vector<64x64xf32>, vector<128x64xf32> -> vector<128x64xf32>
    %c0_8 = arith.constant 0 : index
    %c0_9 = arith.constant 0 : index
    %9 = vector.load %arg5[%c0_8, %c0_9] : memref<1x64xf32, #tpu.memory_space<vmem>>, vector<1x64xf32>
    %10 = vector.broadcast %9 : vector<1x64xf32> to vector<128x64xf32>
    %11 = arith.addf %8, %10 : vector<128x64xf32>
    %12 = math.tanh %11 : vector<128x64xf32>
    %c0_10 = arith.constant 0 : index
    %c0_11 = arith.constant 0 : index
    %13 = vector.load %arg6[%c0_10, %c0_11] : memref<1x64xf32, #tpu.memory_space<vmem>>, vector<1x64xf32>
    %14 = vector.broadcast %13 : vector<1x64xf32> to vector<128x64xf32>
    %15 = arith.mulf %12, %14 : vector<128x64xf32>
    %cst_12 = arith.constant dense<0.000000e+00> : vector<128xf32>
    %16 = vector.multi_reduction <add>, %15, %cst_12 [1] : vector<128x64xf32> to vector<128xf32>
    %c0_13 = arith.constant 0 : index
    %c0_14 = arith.constant 0 : index
    %17 = memref.load %arg7[%c0_13, %c0_14] : memref<1x1xf32, #tpu.memory_space<smem>>
    %18 = vector.broadcast %17 : f32 to vector<128xf32>
    %19 = arith.addf %16, %18 : vector<128xf32>
    %20 = vector.shape_cast %19 : vector<128xf32> to vector<1x128xf32>
    %c0_15 = arith.constant 0 : index
    %c0_16 = arith.constant 0 : index
    %21 = vector.load %arg8[%c0_15, %c0_16] : memref<1x128xf32, #tpu.memory_space<vmem>>, vector<1x128xf32>
    tpu.vector_store %arg8[%c0_15, %c0_16], %20 {strides = array<i32>} : memref<1x128xf32, #tpu.memory_space<vmem>>, vector<1x128xf32>,
    return
  }
  func.func @transform_0(%arg0: i32) -> (i32, i32) {
    %c0_i32 = arith.constant 0 : i32
    %c0_i32_0 = arith.constant 0 : i32
    return %arg0, %c0_i32 : i32, i32
  }
  func.func @transform_1(%arg0: i32) -> (i32, i32) {
    %c0_i32 = arith.constant 0 : i32
    %c0_i32_0 = arith.constant 0 : i32
    %c0_i32_1 = arith.constant 0 : i32
    return %c0_i32, %c0_i32_0 : i32, i32
  }
  func.func @transform_2(%arg0: i32) -> (i32, i32) {
    %c0_i32 = arith.constant 0 : i32
    %c0_i32_0 = arith.constant 0 : i32
    %c0_i32_1 = arith.constant 0 : i32
    return %c0_i32, %c0_i32_0 : i32, i32
  }
  func.func @transform_3(%arg0: i32) -> (i32, i32) {
    %c0_i32 = arith.constant 0 : i32
    %c0_i32_0 = arith.constant 0 : i32
    %c0_i32_1 = arith.constant 0 : i32
    return %c0_i32, %c0_i32_0 : i32, i32
  }
  func.func @transform_4(%arg0: i32) -> (i32, i32) {
    %c0_i32 = arith.constant 0 : i32
    %c0_i32_0 = arith.constant 0 : i32
    %c0_i32_1 = arith.constant 0 : i32
    return %c0_i32, %c0_i32_0 : i32, i32
  }
  func.func @transform_5(%arg0: i32) -> (i32, i32) {
    %c0_i32 = arith.constant 0 : i32
    %c0_i32_0 = arith.constant 0 : i32
    %c0_i32_1 = arith.constant 0 : i32
    return %c0_i32, %c0_i32_0 : i32, i32
  }
  func.func @transform_6(%arg0: i32) -> (i32, i32) {
    %c0_i32 = arith.constant 0 : i32
    %c0_i32_0 = arith.constant 0 : i32
    %c0_i32_1 = arith.constant 0 : i32
    return %c0_i32, %c0_i32_0 : i32, i32
  }
  func.func @transform_7(%arg0: i32) -> (i32, i32) {
    %c0_i32 = arith.constant 0 : i32
    %c0_i32_0 = arith.constant 0 : i32
    return %c0_i32, %arg0 : i32, i32
  }
}

</mosaic_0001>

<llo_original>
// kernel: tpu_custom_call.1
$region0: #{tpu_custom_call.1}
  #allocation0 [shape = 'u32[]', space=smem, size = 0x4, offset = 0x4, fixed_abs, tag = 'smem constant byte address 0x4 - core index']
  #allocation1 [shape = 'u32[144,128]{1,0:T(1,128)}', space=vmem, size = 0x12000, scoped, tag = 'internal scratch']
  #allocation2 [shape = 'f32[1,1]{1,0:T(1,128)S(6)}', space=smem, size = 0x200, scoped, tag = 'scoped memory for tpu_custom_call.1']
  %s0 = inlined_call_operand.hbm [shape: f32[8,32], index: 0, kind: input, shape index: {}]
  %s1 = inlined_call_operand.hbm [shape: f32[32,64], index: 1, kind: input, shape index: {}]
  %s2 = inlined_call_operand.vmem [shape: f32[1,64], index: 2, kind: input, shape index: {}]
  %s3 = inlined_call_operand.hbm [shape: f32[64,64], index: 3, kind: input, shape index: {}]
  %s4 = inlined_call_operand.vmem [shape: f32[1,64], index: 4, kind: input, shape index: {}]
  %s5 = inlined_call_operand.vmem [shape: f32[1,64], index: 5, kind: input, shape index: {}]
  %s6 = inlined_call_operand.<no memory space> [shape: f32[1,1], index: 6, kind: input, shape index: {}]
  %s7 = inlined_call_operand.hbm [shape: f32[1,128], index: 7, kind: output, shape index: {}]
  %s8 = sld [smem:[#allocation0]]
  $region50: #{tpu_custom_call.1} parent=0
    _
  %s10 = ssub.s32 1, %s8
  %s11 = scalar_select 0, %s10, %s8
  %12 = sst [smem:[#allocation2]] %s6
  $region1: #{tpu_custom_call.1} parent=0
    #allocation3 [shape = 'u8[65536]{0}', space=vmem, size = 0x10000, scoped, tag = 'input window, operand 0, single buffered']
    #allocation4 [shape = 's32[1]{0}', space=sflag, size = 0x4, scoped, tag = 'scoped memory for tpu_custom_call.1']
    #allocation5 [shape = 's32[1]{0}', space=sflag, size = 0x4, scoped, tag = 'scoped memory for tpu_custom_call.1']
    #allocation6 [shape = 'u8[16384]{0}', space=vmem, size = 0x4000, scoped, tag = 'input window, operand 1, single buffered']
    #allocation7 [shape = 's32[1]{0}', space=sflag, size = 0x4, scoped, tag = 'scoped memory for tpu_custom_call.1']
    #allocation8 [shape = 'u8[32768]{0}', space=vmem, size = 0x8000, scoped, tag = 'input window, operand 3, single buffered']
    #allocation9 [shape = 'u8[512]{0}', space=vmem, size = 0x400, scoped, tag = 'output window, operand 0, single buffered']
    %13 = vsyncpa [#allocation4], 0
    %14 = vsyncpa [#allocation7], 0
    %15 = vsyncpa [#allocation5], 0
    // Predicated region
    $region2: #{tpu_custom_call.1} parent=1 // pred_check
      _
    $region3: #{tpu_custom_call.1} parent=1 // pred_check_branch
      %17 = sbr.rel (0) target = $region5
    $region4: #{tpu_custom_call.1} parent=1 // pred_region
      %s19 = ssub.s32 2048, 128
      %20 = vsyncadd [#allocation4], %s19
      %s21 = sshll.u32 [#allocation3], 4
      %s22 = int_to_ptr.vmem [resolvable:$true] %s21
      %27 = dma.hbm_to_vmem [thread:$0]  %s0, 128, %s22, [#allocation4], 128, 128, 8
    $region5: #{tpu_custom_call.1} parent=1 // pred_fallthru
      _
    // Predicated region
    $region6: #{tpu_custom_call.1} parent=1 // pred_check
      _
    $region7: #{tpu_custom_call.1} parent=1 // pred_check_branch
      %29 = sbr.rel (0) target = $region9
    $region8: #{tpu_custom_call.1} parent=1 // pred_region
      %s31 = ssub.s32 512, 512
      %32 = vsyncadd [#allocation7], %s31
      %s33 = sshll.u32 [#allocation6], 4
      %s34 = int_to_ptr.vmem [resolvable:$true] %s33
      %39 = dma.hbm_to_vmem [thread:$0]  %s1, 512, %s34, [#allocation7], 128, 128, 8
    $region9: #{tpu_custom_call.1} parent=1 // pred_fallthru
      _
    // Predicated region
    $region10: #{tpu_custom_call.1} parent=1 // pred_check
      _
    $region11: #{tpu_custom_call.1} parent=1 // pred_check_branch
      %41 = sbr.rel (0) target = $region13
    $region12: #{tpu_custom_call.1} parent=1 // pred_region
      _
    $region13: #{tpu_custom_call.1} parent=1 // pred_fallthru
      _
    // Predicated region
    $region14: #{tpu_custom_call.1} parent=1 // pred_check
      _
    $region15: #{tpu_custom_call.1} parent=1 // pred_check_branch
      %43 = sbr.rel (0) target = $region17
    $region16: #{tpu_custom_call.1} parent=1 // pred_region
      %s45 = ssub.s32 1024, 1024
      %46 = vsyncadd [#allocation7], %s45
      %s47 = sshll.u32 [#allocation8], 4
      %s48 = int_to_ptr.vmem [resolvable:$true] %s47
      %53 = dma.hbm_to_vmem [thread:$0]  %s3, 1024, %s48, [#allocation7], 128, 128, 8
    $region17: #{tpu_custom_call.1} parent=1 // pred_fallthru
      _
    // Predicated region
    $region18: #{tpu_custom_call.1} parent=1 // pred_check
      _
    $region19: #{tpu_custom_call.1} parent=1 // pred_check_branch
      %55 = sbr.rel (0) target = $region21
    $region20: #{tpu_custom_call.1} parent=1 // pred_region
      _
    $region21: #{tpu_custom_call.1} parent=1 // pred_fallthru
      _
    // Predicated region
    $region22: #{tpu_custom_call.1} parent=1 // pred_check
      _
    $region23: #{tpu_custom_call.1} parent=1 // pred_check_branch
      %57 = sbr.rel (0) target = $region25
    $region24: #{tpu_custom_call.1} parent=1 // pred_region
      _
    $region25: #{tpu_custom_call.1} parent=1 // pred_fallthru
      _
    // Predicated region
    $region26: #{tpu_custom_call.1} parent=1 // pred_check
      _
    $region27: #{tpu_custom_call.1} parent=1 // pred_check_branch
      %59 = sbr.rel (0) target = $region29
    $region28: #{tpu_custom_call.1} parent=1 // pred_region
      _
    $region29: #{tpu_custom_call.1} parent=1 // pred_fallthru
      _
    // Predicated region
    $region30: #{tpu_custom_call.1} parent=1 // pred_check
      _
    $region31: #{tpu_custom_call.1} parent=1 // pred_check_branch
      %61 = sbr.rel (0) target = $region33
    $region32: #{tpu_custom_call.1} parent=1 // pred_region
      %62 = dma.done [#allocation4], 2048
    $region33: #{tpu_custom_call.1} parent=1 // pred_fallthru
      _
    // Predicated region
    $region34: #{tpu_custom_call.1} parent=1 // pred_check
      _
    $region35: #{tpu_custom_call.1} parent=1 // pred_check_branch
      %64 = sbr.rel (0) target = $region37
    $region36: #{tpu_custom_call.1} parent=1 // pred_region
      %65 = dma.done [#allocation7], 512
    $region37: #{tpu_custom_call.1} parent=1 // pred_fallthru
      _
    // Predicated region
    $region38: #{tpu_custom_call.1} parent=1 // pred_check
      _
    $region39: #{tpu_custom_call.1} parent=1 // pred_check_branch
      %67 = sbr.rel (0) target = $region41
    $region40: #{tpu_custom_call.1} parent=1 // pred_region
      %68 = dma.done [#allocation7], 1024
    $region41: #{tpu_custom_call.1} parent=1 // pred_fallthru
      _
    %v69 = vld [vmem:[#allocation3] sm:$0xff]
    %v70 = vld [vmem:[#allocation3 + $0x8] sm:$0xff]
    %v71 = vld [vmem:[#allocation3 + $0x10] sm:$0xff]
    %v72 = vld [vmem:[#allocation3 + $0x18] sm:$0xff]
    %v73 = vld [vmem:[#allocation3 + $0x20] sm:$0xff]
    %v74 = vld [vmem:[#allocation3 + $0x28] sm:$0xff]
    %v75 = vld [vmem:[#allocation3 + $0x30] sm:$0xff]
    %v76 = vld [vmem:[#allocation3 + $0x38] sm:$0xff]
    %v77 = vld [vmem:[#allocation3 + $0x40] sm:$0xff]
    %v78 = vld [vmem:[#allocation3 + $0x48] sm:$0xff]
    %v79 = vld [vmem:[#allocation3 + $0x50] sm:$0xff]
    %v80 = vld [vmem:[#allocation3 + $0x58] sm:$0xff]
    %v81 = vld [vmem:[#allocation3 + $0x60] sm:$0xff]
    %v82 = vld [vmem:[#allocation3 + $0x68] sm:$0xff]
    %v83 = vld [vmem:[#allocation3 + $0x70] sm:$0xff]
    %v84 = vld [vmem:[#allocation3 + $0x78] sm:$0xff]
    %v85 = vld [vmem:[#allocation6] sm:$0xff]
    %v86 = vld [vmem:[#allocation6 + $0x8] sm:$0xff]
    %v87 = vld [vmem:[#allocation6 + $0x10] sm:$0xff]
    %v88 = vld [vmem:[#allocation6 + $0x18] sm:$0xff]
    %v89 = vld [vmem:[%s2] sm:$0x1]
    %v91 = vlaneseq
    %v92 = vshrl.u32 %v91, 7
    %v93 = vsub.s32 0, %v92
    %v94 = vrot.slane %v89, %v93
    %vm96 = vcmask 261120
    %v98 = vsel %vm96, %v69, 0
    %v101 = vsel %vm96, %v70, 0
    %v104 = vsel %vm96, %v71, 0
    %v107 = vsel %vm96, %v72, 0
    %v110 = vsel %vm96, %v73, 0
    %v113 = vsel %vm96, %v74, 0
    %v116 = vsel %vm96, %v75, 0
    %v119 = vsel %vm96, %v76, 0
    %v122 = vsel %vm96, %v77, 0
    %v125 = vsel %vm96, %v78, 0
    %v128 = vsel %vm96, %v79, 0
    %v131 = vsel %vm96, %v80, 0
    %v134 = vsel %vm96, %v81, 0
    %v137 = vsel %vm96, %v82, 0
    %v140 = vsel %vm96, %v83, 0
    %v143 = vsel %vm96, %v84, 0
    %145 = vmatprep.subr.mxu0 0.0
    %146 = vmatpush1.msra.mxu0 0.0
    %147 = vmatprep.subr.mxu0 0.0
    %148 = vmatpush1.msra.mxu0 0.0
    %149 = vmatprep.subr.mxu0 0.0
    %150 = vmatpush1.msra.mxu0 0.0
    %151 = vmatprep.subr.mxu0 0.0
    %152 = vmatpush1.msra.mxu0 0.0
    %153 = vmatprep.subr.mxu0 0.0
    %154 = vmatpush1.msra.mxu0 0.0
    %155 = vmatprep.subr.mxu0 0.0
    %156 = vmatpush1.msra.mxu0 0.0
    %157 = vmatprep.subr.mxu0 0.0
    %158 = vmatpush1.msra.mxu0 0.0
    %159 = vmatprep.subr.mxu0 0.0
    %160 = vmatpush1.msra.mxu0 0.0
    %161 = vmatprep.subr.mxu0 0.0
    %162 = vmatpush1.msra.mxu0 0.0
    %163 = vmatprep.subr.mxu0 0.0
    %164 = vmatpush1.msra.mxu0 0.0
    %165 = vmatprep.subr.mxu0 0.0
    %166 = vmatpush1.msra.mxu0 0.0
    %167 = vmatprep.subr.mxu0 0.0
    %168 = vmatpush1.msra.mxu0 0.0
    %169 = vmatprep.subr.mxu0 0.0
    %170 = vmatpush1.msra.mxu0 %v88
    %171 = vmatprep.subr.mxu0 0.0
    %172 = vmatpush1.msra.mxu0 %v87
    %173 = vmatprep.subr.mxu0 0.0
    %174 = vmatpush1.msra.mxu0 %v86
    %175 = vmatprep.subr.mxu0 0.0
    %176 = vmatpush1.msra.mxu0 %v85
    %177 = vmatprep.subr.mxu0 0.0
    %178 = vmatpush2.msra.mxu0 0.0
    %179 = vmatprep.subr.mxu0 0.0
    %180 = vmatpush2.msra.mxu0 0.0
    %181 = vmatprep.subr.mxu0 0.0
    %182 = vmatpush2.msra.mxu0 0.0
    %183 = vmatprep.subr.mxu0 0.0
    %184 = vmatpush2.msra.mxu0 0.0
    %185 = vmatprep.subr.mxu0 0.0
    %186 = vmatpush2.msra.mxu0 0.0
    %187 = vmatprep.subr.mxu0 0.0
    %188 = vmatpush2.msra.mxu0 0.0
    %189 = vmatprep.subr.mxu0 0.0
    %190 = vmatpush2.msra.mxu0 0.0
    %191 = vmatprep.subr.mxu0 0.0
    %192 = vmatpush2.msra.mxu0 0.0
    %193 = vmatprep.subr.mxu0 0.0
    %194 = vmatpush2.msra.mxu0 0.0
    %195 = vmatprep.subr.mxu0 0.0
    %196 = vmatpush2.msra.mxu0 0.0
    %197 = vmatprep.subr.mxu0 0.0
    %198 = vmatpush2.msra.mxu0 0.0
    %199 = vmatprep.subr.mxu0 0.0
    %200 = vmatpush2.msra.mxu0 0.0
    %201 = vmatprep.subr.mxu0 0.0
    %202 = vmatpush2.msra.mxu0 0.0
    %203 = vmatprep.subr.mxu0 0.0
    %204 = vmatpush2.msra.mxu0 0.0
    %205 = vmatprep.subr.mxu0 0.0
    %206 = vmatpush2.msra.mxu0 0.0
    %207 = vmatprep.subr.mxu0 0.0
    %208 = vmatpush2.msra.mxu0 0.0
    %209 = vmatprep.mubr.f32.mxu0 0.0
    %210 = vmatmul.mubr.f32.gmra.mxu0 %v98
    %v211 = vpop.f32.mrf.mxu0
    %v212 = vadd.f32 %v94, %v211
    %v213 = vpop.f32.mrf.mxu0
    %214 = vmatprep.mubr.f32.mxu0 0.0
    %215 = vmatmul.mubr.f32.gmra.mxu0 %v101
    %v216 = vpop.f32.mrf.mxu0
    %v217 = vadd.f32 %v94, %v216
    %v218 = vpop.f32.mrf.mxu0
    %219 = vmatprep.mubr.f32.mxu0 0.0
    %220 = vmatmul.mubr.f32.gmra.mxu0 %v104
    %v221 = vpop.f32.mrf.mxu0
    %v222 = vadd.f32 %v94, %v221
    %v223 = vpop.f32.mrf.mxu0
    %224 = vmatprep.mubr.f32.mxu0 0.0
    %225 = vmatmul.mubr.f32.gmra.mxu0 %v107
    %v226 = vpop.f32.mrf.mxu0
    %v227 = vadd.f32 %v94, %v226
    %v228 = vpop.f32.mrf.mxu0
    %229 = vmatprep.mubr.f32.mxu0 0.0
    %230 = vmatmul.mubr.f32.gmra.mxu0 %v110
    %v231 = vpop.f32.mrf.mxu0
    %v232 = vadd.f32 %v94, %v231
    %v233 = vpop.f32.mrf.mxu0
    %234 = vmatprep.mubr.f32.mxu0 0.0
    %235 = vmatmul.mubr.f32.gmra.mxu0 %v113
    %v236 = vpop.f32.mrf.mxu0
    %v237 = vadd.f32 %v94, %v236
    %v238 = vpop.f32.mrf.mxu0
    %239 = vmatprep.mubr.f32.mxu0 0.0
    %240 = vmatmul.mubr.f32.gmra.mxu0 %v116
    %v241 = vpop.f32.mrf.mxu0
    %v242 = vadd.f32 %v94, %v241
    %v243 = vpop.f32.mrf.mxu0
    %244 = vmatprep.mubr.f32.mxu0 0.0
    %245 = vmatmul.mubr.f32.gmra.mxu0 %v119
    %v246 = vpop.f32.mrf.mxu0
    %v247 = vadd.f32 %v94, %v246
    %v248 = vpop.f32.mrf.mxu0
    %249 = vmatprep.mubr.f32.mxu0 0.0
    %250 = vmatmul.mubr.f32.gmra.mxu0 %v122
    %v251 = vpop.f32.mrf.mxu0
    %v252 = vadd.f32 %v94, %v251
    %v253 = vpop.f32.mrf.mxu0
    %254 = vmatprep.mubr.f32.mxu0 0.0
    %255 = vmatmul.mubr.f32.gmra.mxu0 %v125
    %v256 = vpop.f32.mrf.mxu0
    %v257 = vadd.f32 %v94, %v256
    %v258 = vpop.f32.mrf.mxu0
    %259 = vmatprep.mubr.f32.mxu0 0.0
    %260 = vmatmul.mubr.f32.gmra.mxu0 %v128
    %v261 = vpop.f32.mrf.mxu0
    %v262 = vadd.f32 %v94, %v261
    %v263 = vpop.f32.mrf.mxu0
    %264 = vmatprep.mubr.f32.mxu0 0.0
    %265 = vmatmul.mubr.f32.gmra.mxu0 %v131
    %v266 = vpop.f32.mrf.mxu0
    %v267 = vadd.f32 %v94, %v266
    %v268 = vpop.f32.mrf.mxu0
    %269 = vmatprep.mubr.f32.mxu0 0.0
    %270 = vmatmul.mubr.f32.gmra.mxu0 %v134
    %v271 = vpop.f32.mrf.mxu0
    %v272 = vadd.f32 %v94, %v271
    %v273 = vpop.f32.mrf.mxu0
    %274 = vmatprep.mubr.f32.mxu0 0.0
    %275 = vmatmul.mubr.f32.gmra.mxu0 %v137
    %v276 = vpop.f32.mrf.mxu0
    %v277 = vadd.f32 %v94, %v276
    %v278 = vpop.f32.mrf.mxu0
    %279 = vmatprep.mubr.f32.mxu0 0.0
    %280 = vmatmul.mubr.f32.gmra.mxu0 %v140
    %v281 = vpop.f32.mrf.mxu0
    %v282 = vadd.f32 %v94, %v281
    %v283 = vpop.f32.mrf.mxu0
    %284 = vmatprep.mubr.f32.mxu0 0.0
    %285 = vmatmul.mubr.f32.gmra.mxu0 %v143
    %v286 = vpop.f32.mrf.mxu0
    %v287 = vadd.f32 %v94, %v286
    %v288 = vpop.f32.mrf.mxu0
    %289 = vdwg.mxu0
    %v290 = vtanh.pop %v212
    %v291 = vtanh.pop %v217
    %v292 = vtanh.pop %v222
    %v293 = vtanh.pop %v227
    %v294 = vtanh.pop %v232
    %v295 = vtanh.pop %v237
    %v296 = vtanh.pop %v242
    %v297 = vtanh.pop %v247
    %v298 = vtanh.pop %v252
    %v299 = vtanh.pop %v257
    %v300 = vtanh.pop %v262
    %v301 = vtanh.pop %v267
    %v302 = vtanh.pop %v272
    %v303 = vtanh.pop %v277
    %v304 = vtanh.pop %v282
    %v305 = vtanh.pop %v287
    %v306 = vld [vmem:[#allocation8] sm:$0xff]
    %v307 = vld [vmem:[#allocation8 + $0x8] sm:$0xff]
    %v308 = vld [vmem:[#allocation8 + $0x10] sm:$0xff]
    %v309 = vld [vmem:[#allocation8 + $0x18] sm:$0xff]
    %v310 = vld [vmem:[#allocation8 + $0x20] sm:$0xff]
    %v311 = vld [vmem:[#allocation8 + $0x28] sm:$0xff]
    %v312 = vld [vmem:[#allocation8 + $0x30] sm:$0xff]
    %v313 = vld [vmem:[#allocation8 + $0x38] sm:$0xff]
    %v314 = vld [vmem:[%s4] sm:$0x1]
    %v316 = vlaneseq
    %v317 = vshrl.u32 %v316, 7
    %v318 = vsub.s32 0, %v317
    %v319 = vrot.slane %v314, %v318
    %vm321 = vcmask 523264
    %v323 = vsel %vm321, %v290, 0
    %v326 = vsel %vm321, %v291, 0
    %v329 = vsel %vm321, %v292, 0
    %v332 = vsel %vm321, %v293, 0
    %v335 = vsel %vm321, %v294, 0
    %v338 = vsel %vm321, %v295, 0
    %v341 = vsel %vm321, %v296, 0
    %v344 = vsel %vm321, %v297, 0
    %v347 = vsel %vm321, %v298, 0
    %v350 = vsel %vm321, %v299, 0
    %v353 = vsel %vm321, %v300, 0
    %v356 = vsel %vm321, %v301, 0
    %v359 = vsel %vm321, %v302, 0
    %v362 = vsel %vm321, %v303, 0
    %v365 = vsel %vm321, %v304, 0
    %v368 = vsel %vm321, %v305, 0
    %370 = vmatprep.subr.mxu0 0.0
    %371 = vmatpush1.msra.mxu0 0.0
    %372 = vmatprep.subr.mxu0 0.0
    %373 = vmatpush1.msra.mxu0 0.0
    %374 = vmatprep.subr.mxu0 0.0
    %375 = vmatpush1.msra.mxu0 0.0
    %376 = vmatprep.subr.mxu0 0.0
    %377 = vmatpush1.msra.mxu0 0.0
    %378 = vmatprep.subr.mxu0 0.0
    %379 = vmatpush1.msra.mxu0 0.0
    %380 = vmatprep.subr.mxu0 0.0
    %381 = vmatpush1.msra.mxu0 0.0
    %382 = vmatprep.subr.mxu0 0.0
    %383 = vmatpush1.msra.mxu0 0.0
    %384 = vmatprep.subr.mxu0 0.0
    %385 = vmatpush1.msra.mxu0 0.0
    %386 = vmatprep.subr.mxu0 0.0
    %387 = vmatpush1.msra.mxu0 %v313
    %388 = vmatprep.subr.mxu0 0.0
    %389 = vmatpush1.msra.mxu0 %v312
    %390 = vmatprep.subr.mxu0 0.0
    %391 = vmatpush1.msra.mxu0 %v311
    %392 = vmatprep.subr.mxu0 0.0
    %393 = vmatpush1.msra.mxu0 %v310
    %394 = vmatprep.subr.mxu0 0.0
    %395 = vmatpush1.msra.mxu0 %v309
    %396 = vmatprep.subr.mxu0 0.0
    %397 = vmatpush1.msra.mxu0 %v308
    %398 = vmatprep.subr.mxu0 0.0
    %399 = vmatpush1.msra.mxu0 %v307
    %400 = vmatprep.subr.mxu0 0.0
    %401 = vmatpush1.msra.mxu0 %v306
    %402 = vmatprep.subr.mxu0 0.0
    %403 = vmatpush2.msra.mxu0 0.0
    %404 = vmatprep.subr.mxu0 0.0
    %405 = vmatpush2.msra.mxu0 0.0
    %406 = vmatprep.subr.mxu0 0.0
    %407 = vmatpush2.msra.mxu0 0.0
    %408 = vmatprep.subr.mxu0 0.0
    %409 = vmatpush2.msra.mxu0 0.0
    %410 = vmatprep.subr.mxu0 0.0
    %411 = vmatpush2.msra.mxu0 0.0
    %412 = vmatprep.subr.mxu0 0.0
    %413 = vmatpush2.msra.mxu0 0.0
    %414 = vmatprep.subr.mxu0 0.0
    %415 = vmatpush2.msra.mxu0 0.0
    %416 = vmatprep.subr.mxu0 0.0
    %417 = vmatpush2.msra.mxu0 0.0
    %418 = vmatprep.subr.mxu0 0.0
    %419 = vmatpush2.msra.mxu0 0.0
    %420 = vmatprep.subr.mxu0 0.0
    %421 = vmatpush2.msra.mxu0 0.0
    %422 = vmatprep.subr.mxu0 0.0
    %423 = vmatpush2.msra.mxu0 0.0
    %424 = vmatprep.subr.mxu0 0.0
    %425 = vmatpush2.msra.mxu0 0.0
    %426 = vmatprep.subr.mxu0 0.0
    %427 = vmatpush2.msra.mxu0 0.0
    %428 = vmatprep.subr.mxu0 0.0
    %429 = vmatpush2.msra.mxu0 0.0
    %430 = vmatprep.subr.mxu0 0.0
    %431 = vmatpush2.msra.mxu0 0.0
    %432 = vmatprep.subr.mxu0 0.0
    %433 = vmatpush2.msra.mxu0 0.0
    %434 = vmatprep.mubr.f32.mxu0 0.0
    %435 = vmatmul.mubr.f32.gmra.mxu0 %v323
    %v436 = vpop.f32.mrf.mxu0
    %v437 = vadd.f32 %v319, %v436
    %v438 = vpop.f32.mrf.mxu0
    %439 = vmatprep.mubr.f32.mxu0 0.0
    %440 = vmatmul.mubr.f32.gmra.mxu0 %v326
    %v441 = vpop.f32.mrf.mxu0
    %v442 = vadd.f32 %v319, %v441
    %v443 = vpop.f32.mrf.mxu0
    %444 = vmatprep.mubr.f32.mxu0 0.0
    %445 = vmatmul.mubr.f32.gmra.mxu0 %v329
    %v446 = vpop.f32.mrf.mxu0
    %v447 = vadd.f32 %v319, %v446
    %v448 = vpop.f32.mrf.mxu0
    %449 = vmatprep.mubr.f32.mxu0 0.0
    %450 = vmatmul.mubr.f32.gmra.mxu0 %v332
    %v451 = vpop.f32.mrf.mxu0
    %v452 = vadd.f32 %v319, %v451
    %v453 = vpop.f32.mrf.mxu0
    %454 = vmatprep.mubr.f32.mxu0 0.0
    %455 = vmatmul.mubr.f32.gmra.mxu0 %v335
    %v456 = vpop.f32.mrf.mxu0
    %v457 = vadd.f32 %v319, %v456
    %v458 = vpop.f32.mrf.mxu0
    %459 = vmatprep.mubr.f32.mxu0 0.0
    %460 = vmatmul.mubr.f32.gmra.mxu0 %v338
    %v461 = vpop.f32.mrf.mxu0
    %v462 = vadd.f32 %v319, %v461
    %v463 = vpop.f32.mrf.mxu0
    %464 = vmatprep.mubr.f32.mxu0 0.0
    %465 = vmatmul.mubr.f32.gmra.mxu0 %v341
    %v466 = vpop.f32.mrf.mxu0
    %v467 = vadd.f32 %v319, %v466
    %v468 = vpop.f32.mrf.mxu0
    %469 = vmatprep.mubr.f32.mxu0 0.0
    %470 = vmatmul.mubr.f32.gmra.mxu0 %v344
    %v471 = vpop.f32.mrf.mxu0
    %v472 = vadd.f32 %v319, %v471
    %v473 = vpop.f32.mrf.mxu0
    %474 = vmatprep.mubr.f32.mxu0 0.0
    %475 = vmatmul.mubr.f32.gmra.mxu0 %v347
    %v476 = vpop.f32.mrf.mxu0
    %v477 = vadd.f32 %v319, %v476
    %v478 = vpop.f32.mrf.mxu0
    %479 = vmatprep.mubr.f32.mxu0 0.0
    %480 = vmatmul.mubr.f32.gmra.mxu0 %v350
    %v481 = vpop.f32.mrf.mxu0
    %v482 = vadd.f32 %v319, %v481
    %v483 = vpop.f32.mrf.mxu0
    %484 = vmatprep.mubr.f32.mxu0 0.0
    %485 = vmatmul.mubr.f32.gmra.mxu0 %v353
    %v486 = vpop.f32.mrf.mxu0
    %v487 = vadd.f32 %v319, %v486
    %v488 = vpop.f32.mrf.mxu0
    %489 = vmatprep.mubr.f32.mxu0 0.0
    %490 = vmatmul.mubr.f32.gmra.mxu0 %v356
    %v491 = vpop.f32.mrf.mxu0
    %v492 = vadd.f32 %v319, %v491
    %v493 = vpop.f32.mrf.mxu0
    %494 = vmatprep.mubr.f32.mxu0 0.0
    %495 = vmatmul.mubr.f32.gmra.mxu0 %v359
    %v496 = vpop.f32.mrf.mxu0
    %v497 = vadd.f32 %v319, %v496
    %v498 = vpop.f32.mrf.mxu0
    %499 = vmatprep.mubr.f32.mxu0 0.0
    %500 = vmatmul.mubr.f32.gmra.mxu0 %v362
    %v501 = vpop.f32.mrf.mxu0
    %v502 = vadd.f32 %v319, %v501
    %v503 = vpop.f32.mrf.mxu0
    %504 = vmatprep.mubr.f32.mxu0 0.0
    %505 = vmatmul.mubr.f32.gmra.mxu0 %v365
    %v506 = vpop.f32.mrf.mxu0
    %v507 = vadd.f32 %v319, %v506
    %v508 = vpop.f32.mrf.mxu0
    %509 = vmatprep.mubr.f32.mxu0 0.0
    %510 = vmatmul.mubr.f32.gmra.mxu0 %v368
    %v511 = vpop.f32.mrf.mxu0
    %v512 = vadd.f32 %v319, %v511
    %v513 = vpop.f32.mrf.mxu0
    %514 = vdwg.mxu0
    %v515 = vtanh.pop %v437
    %v516 = vtanh.pop %v442
    %v517 = vtanh.pop %v447
    %v518 = vtanh.pop %v452
    %v519 = vtanh.pop %v457
    %v520 = vtanh.pop %v462
    %v521 = vtanh.pop %v467
    %v522 = vtanh.pop %v472
    %v523 = vtanh.pop %v477
    %v524 = vtanh.pop %v482
    %v525 = vtanh.pop %v487
    %v526 = vtanh.pop %v492
    %v527 = vtanh.pop %v497
    %v528 = vtanh.pop %v502
    %v529 = vtanh.pop %v507
    %v530 = vtanh.pop %v512
    %v531 = vld [vmem:[%s5] sm:$0x1]
    %v533 = vlaneseq
    %v534 = vshrl.u32 %v533, 7
    %v535 = vsub.s32 0, %v534
    %v536 = vrot.slane %v531, %v535
    %v538 = vmul.f32 %v515, %v536
    %v539 = vmul.f32 %v516, %v536
    %v540 = vmul.f32 %v517, %v536
    %v541 = vmul.f32 %v518, %v536
    %v542 = vmul.f32 %v519, %v536
    %v543 = vmul.f32 %v520, %v536
    %v544 = vmul.f32 %v521, %v536
    %v545 = vmul.f32 %v522, %v536
    %v546 = vmul.f32 %v523, %v536
    %v547 = vmul.f32 %v524, %v536
    %v548 = vmul.f32 %v525, %v536
    %v549 = vmul.f32 %v526, %v536
    %v550 = vmul.f32 %v527, %v536
    %v551 = vmul.f32 %v528, %v536
    %v552 = vmul.f32 %v529, %v536
    %v553 = vmul.f32 %v530, %v536
    %v554 = vsel %vm321, %v538, 0.0
    %555 = vadd.xlane.f32.xlu0 %v554
    %v556 = vpop.xlane.xlu0 %555
    %v557 = vsel %vm321, %v539, 0.0
    %558 = vadd.xlane.f32.xlu0 %v557
    %v559 = vpop.xlane.xlu0 %558
    %v560 = vsel %vm321, %v540, 0.0
    %561 = vadd.xlane.f32.xlu0 %v560
    %v562 = vpop.xlane.xlu0 %561
    %v563 = vsel %vm321, %v541, 0.0
    %564 = vadd.xlane.f32.xlu0 %v563
    %v565 = vpop.xlane.xlu0 %564
    %v566 = vsel %vm321, %v542, 0.0
    %567 = vadd.xlane.f32.xlu0 %v566
    %v568 = vpop.xlane.xlu0 %567
    %v569 = vsel %vm321, %v543, 0.0
    %570 = vadd.xlane.f32.xlu0 %v569
    %v571 = vpop.xlane.xlu0 %570
    %v572 = vsel %vm321, %v544, 0.0
    %573 = vadd.xlane.f32.xlu0 %v572
    %v574 = vpop.xlane.xlu0 %573
    %v575 = vsel %vm321, %v545, 0.0
    %576 = vadd.xlane.f32.xlu0 %v575
    %v577 = vpop.xlane.xlu0 %576
    %v578 = vsel %vm321, %v546, 0.0
    %579 = vadd.xlane.f32.xlu0 %v578
    %v580 = vpop.xlane.xlu0 %579
    %v581 = vsel %vm321, %v547, 0.0
    %582 = vadd.xlane.f32.xlu0 %v581
    %v583 = vpop.xlane.xlu0 %582
    %v584 = vsel %vm321, %v548, 0.0
    %585 = vadd.xlane.f32.xlu0 %v584
    %v586 = vpop.xlane.xlu0 %585
    %v587 = vsel %vm321, %v549, 0.0
    %588 = vadd.xlane.f32.xlu0 %v587
    %v589 = vpop.xlane.xlu0 %588
    %v590 = vsel %vm321, %v550, 0.0
    %591 = vadd.xlane.f32.xlu0 %v590
    %v592 = vpop.xlane.xlu0 %591
    %v593 = vsel %vm321, %v551, 0.0
    %594 = vadd.xlane.f32.xlu0 %v593
    %v595 = vpop.xlane.xlu0 %594
    %v596 = vsel %vm321, %v552, 0.0
    %597 = vadd.xlane.f32.xlu0 %v596
    %v598 = vpop.xlane.xlu0 %597
    %v599 = vsel %vm321, %v553, 0.0
    %600 = vadd.xlane.f32.xlu0 %v599
    %v601 = vpop.xlane.xlu0 %600
    %s602 = sld [smem:[#allocation2]]
    %v603 = vstv %s602
    %v604 = vadd.f32 %v556, %v603
    %v605 = vadd.f32 %v559, %v603
    %v606 = vadd.f32 %v562, %v603
    %v607 = vadd.f32 %v565, %v603
    %v608 = vadd.f32 %v568, %v603
    %v609 = vadd.f32 %v571, %v603
    %v610 = vadd.f32 %v574, %v603
    %v611 = vadd.f32 %v577, %v603
    %v612 = vadd.f32 %v580, %v603
    %v613 = vadd.f32 %v583, %v603
    %v614 = vadd.f32 %v586, %v603
    %v615 = vadd.f32 %v589, %v603
    %v616 = vadd.f32 %v592, %v603
    %v617 = vadd.f32 %v595, %v603
    %v618 = vadd.f32 %v598, %v603
    %v619 = vadd.f32 %v601, %v603
    %v636 = vlaneseq
    %v637 = vand.u32 %v636, 127
    %v638 = vlaneseq
    %v639 = vshrl.u32 %v638, 7
    %v640 = vsub.s32 %v637, %v639
    %v641 = vrot.slane %v604, %v640
    %v642 = vadd.s32 %v637, 4294967288
    %v643 = vlaneseq
    %v644 = vshrl.u32 %v643, 7
    %v645 = vsub.s32 %v642, %v644
    %v646 = vrot.slane %v605, %v645
    %vm647 = vcmask 130112
    %v648 = vsel %vm647, %v646, %v641
    %v649 = vadd.s32 %v637, 4294967280
    %v650 = vlaneseq
    %v651 = vshrl.u32 %v650, 7
    %v652 = vsub.s32 %v649, %v651
    %v653 = vrot.slane %v606, %v652
    %vm654 = vcmask 195712
    %v655 = vsel %vm654, %v653, %v648
    %v656 = vadd.s32 %v637, 4294967272
    %v657 = vlaneseq
    %v658 = vshrl.u32 %v657, 7
    %v659 = vsub.s32 %v656, %v658
    %v660 = vrot.slane %v607, %v659
    %vm661 = vcmask 261312
    %v662 = vsel %vm661, %v660, %v655
    %v663 = vadd.s32 %v637, 4294967264
    %v664 = vlaneseq
    %v665 = vshrl.u32 %v664, 7
    %v666 = vsub.s32 %v663, %v665
    %v667 = vrot.slane %v608, %v666
    %vm668 = vcmask 326912
    %v669 = vsel %vm668, %v667, %v662
    %v670 = vadd.s32 %v637, 4294967256
    %v671 = vlaneseq
    %v672 = vshrl.u32 %v671, 7
    %v673 = vsub.s32 %v670, %v672
    %v674 = vrot.slane %v609, %v673
    %vm675 = vcmask 392512
    %v676 = vsel %vm675, %v674, %v669
    %v677 = vadd.s32 %v637, 4294967248
    %v678 = vlaneseq
    %v679 = vshrl.u32 %v678, 7
    %v680 = vsub.s32 %v677, %v679
    %v681 = vrot.slane %v610, %v680
    %vm682 = vcmask 458112
    %v683 = vsel %vm682, %v681, %v676
    %v684 = vadd.s32 %v637, 4294967240
    %v685 = vlaneseq
    %v686 = vshrl.u32 %v685, 7
    %v687 = vsub.s32 %v684, %v686
    %v688 = vrot.slane %v611, %v687
    %vm689 = vcmask 523712
    %v690 = vsel %vm689, %v688, %v683
    %v691 = vadd.s32 %v637, 4294967232
    %v692 = vlaneseq
    %v693 = vshrl.u32 %v692, 7
    %v694 = vsub.s32 %v691, %v693
    %v695 = vrot.slane %v612, %v694
    %vm696 = vcmask 589312
    %v697 = vsel %vm696, %v695, %v690
    %v698 = vadd.s32 %v637, 4294967224
    %v699 = vlaneseq
    %v700 = vshrl.u32 %v699, 7
    %v701 = vsub.s32 %v698, %v700
    %v702 = vrot.slane %v613, %v701
    %vm703 = vcmask 654912
    %v704 = vsel %vm703, %v702, %v697
    %v705 = vadd.s32 %v637, 4294967216
    %v706 = vlaneseq
    %v707 = vshrl.u32 %v706, 7
    %v708 = vsub.s32 %v705, %v707
    %v709 = vrot.slane %v614, %v708
    %vm710 = vcmask 720512
    %v711 = vsel %vm710, %v709, %v704
    %v712 = vadd.s32 %v637, 4294967208
    %v713 = vlaneseq
    %v714 = vshrl.u32 %v713, 7
    %v715 = vsub.s32 %v712, %v714
    %v716 = vrot.slane %v615, %v715
    %vm717 = vcmask 786112
    %v718 = vsel %vm717, %v716, %v711
    %v719 = vadd.s32 %v637, 4294967200
    %v720 = vlaneseq
    %v721 = vshrl.u32 %v720, 7
    %v722 = vsub.s32 %v719, %v721
    %v723 = vrot.slane %v616, %v722
    %vm724 = vcmask 851712
    %v725 = vsel %vm724, %v723, %v718
    %v726 = vadd.s32 %v637, 4294967192
    %v727 = vlaneseq
    %v728 = vshrl.u32 %v727, 7
    %v729 = vsub.s32 %v726, %v728
    %v730 = vrot.slane %v617, %v729
    %vm731 = vcmask 917312
    %v732 = vsel %vm731, %v730, %v725
    %v733 = vadd.s32 %v637, 4294967184
    %v734 = vlaneseq
    %v735 = vshrl.u32 %v734, 7
    %v736 = vsub.s32 %v733, %v735
    %v737 = vrot.slane %v618, %v736
    %vm738 = vcmask 982912
    %v739 = vsel %vm738, %v737, %v732
    %v740 = vadd.s32 %v637, 4294967176
    %v741 = vlaneseq
    %v742 = vshrl.u32 %v741, 7
    %v743 = vsub.s32 %v740, %v742
    %v744 = vrot.slane %v619, %v743
    %vm745 = vcmask 1048512
    %v746 = vsel %vm745, %v744, %v739
    %748 = vst [vmem:[#allocation9] sm:$0x1] %v746
    // Predicated region
    $region42: #{tpu_custom_call.1} parent=1 // pred_check
      _
    $region43: #{tpu_custom_call.1} parent=1 // pred_check_branch
      %750 = sbr.rel (0) target = $region45
    $region44: #{tpu_custom_call.1} parent=1 // pred_region
      %s752 = ssub.s32 16, 16
      %753 = vsyncadd [#allocation5], %s752
      %s755 = sshll.u32 [#allocation9], 4
      %s756 = int_to_ptr.vmem [resolvable:$true] %s755
      %758 = dma.vmem_to_hbm [thread:$0]  %s756, 16, %s7, [#allocation5]
    $region45: #{tpu_custom_call.1} parent=1 // pred_fallthru
      _
    // Predicated region
    $region46: #{tpu_custom_call.1} parent=1 // pred_check
      _
    $region47: #{tpu_custom_call.1} parent=1 // pred_check_branch
      %760 = sbr.rel (0) target = $region49
    $region48: #{tpu_custom_call.1} parent=1 // pred_region
      %761 = dma.done [#allocation5], 16
    $region49: #{tpu_custom_call.1} parent=1 // pred_fallthru
      _
    %762 = vsyncpa [#allocation4], 1
    %763 = vsyncpa [#allocation7], 1
    %764 = vsyncpa [#allocation5], 1

</llo_original>
